<compile_context>
chip_gen: v6e
topology: v6e:2x2x1
jax: 0.10.0
libtpu: 0.0.40
codegen_flags: <defaults>
</compile_context>

<pallas_src>
import functools

import jax
import jax.numpy as jnp
from jax.experimental import pallas as pl
from jax.experimental.pallas import tpu as pltpu


_DEFAULT_VMEM_LIMIT_BYTES = 32 * 1024 * 1024  # safe per-core everywhere (v7x: 64 MiB/core)


def _rope_kernel(q_ref, k_ref, cs_ref, qo_ref, ko_ref, *, heads, head_dim):
    # q_ref/k_ref/qo_ref/ko_ref: (ts, H*D) tiles; cs_ref: (ts, D) packed [cos_half | sin_half].
    hd = heads * head_dim
    half = head_dim // 2

    # Compute in the I/O dtype (matches the PyTorch reference, which promotes the
    # cached tables to q.dtype and multiplies there).
    q = q_ref[...]
    k = k_ref[...]
    cs = cs_ref[...]

    cos_h = cs[:, :half]   # (ts, D/2)
    sin_h = cs[:, half:]   # (ts, D/2)

    # Expand once per tile to the folded (ts, H*D) lane layout.
    #   cos       = [cos_h, cos_h] per head
    #   sin_signed = [-sin_h, sin_h] per head  (rotate_half's sign folded in)
    # Pure VPU/XLU slack: this kernel is HBM-bound, so the expansion hides under DMA.
    cos = jnp.concatenate([cos_h, cos_h] * heads, axis=-1)
    sin = jnp.concatenate([-sin_h, sin_h] * heads, axis=-1)

    # Per-head rotate_half in the head-major folded lane layout (sign lives in `sin`):
    #   rot(x)[h*D + d] = x[h*D + (d + D/2) % D]
    # Two whole-axis XLU rolls + one static lane select.  Mask is built full-width
    # directly (no per-head concatenate).
    lane = jax.lax.broadcasted_iota(jnp.int32, (1, hd), 1)
    if head_dim & (head_dim - 1) == 0:
        first_half = (lane & (head_dim - 1)) < half
    else:
        first_half = (lane % head_dim) < half

    def rotate(x):
        fwd = pltpu.roll(x, shift=half, axis=1)        # x[.., l - D/2]  (valid for d >= D/2)
        bwd = pltpu.roll(x, shift=hd - half, axis=1)   # x[.., l + D/2]  (valid for d <  D/2)
        return jnp.where(first_half, bwd, fwd)

    qo_ref[...] = (q * cos + rotate(q) * sin).astype(qo_ref.dtype)
    ko_ref[...] = (k * cos + rotate(k) * sin).astype(ko_ref.dtype)


def _choose_seq_tile(B, S, H, D, dtype, vmem_limit_bytes):
    """Pick a sublane-aligned seq tile in the ~512-1024-row mem-bound sweet spot.

    Prefers a divisor of S (dense tiles); otherwise the caller uses a pl.cdiv
    grid with a ragged last tile.  When B == 1, caps the tile so the grid has at
    least two steps and both v7x TensorCores get work.
    """
    itemsize = jnp.dtype(dtype).itemsize
    sublane = 8 * max(1, 4 // itemsize)            # 8 rows f32, 16 bf16
    hd = H * D
    # Double-buffered per-row working set: q,k in + q,k out (hd wide) + cs tile (D wide).
    per_row = 2 * (4 * hd + D) * itemsize
    cap = max(sublane, (vmem_limit_bytes * 3 // 4) // per_row)
    cap = min(cap, 1024)                           # 512-1024 rows ~ HBM roofline plateau
    if B == 1 and S > sublane:
        # Megacore (v7x): keep >= 2 parallel grid steps.
        half_s = -(-((S + 1) // 2) // sublane) * sublane
        cap = min(cap, half_s)
    if S <= cap:
        return S
    t = (cap // sublane) * sublane
    best = max(t, sublane)
    while t >= sublane:
        if S % t == 0:
            return t
        t -= sublane
    return best                                    # ragged last tile handled by pl.cdiv grid


def rope_pallas(q, k, cs, *, seq_tile=None, vmem_limit_bytes=None, alias_outputs=False):
    """Apply RoPE.

    q, k: [B,S,H,D].  cs: [B,S,D] packed gathered table, lanes [0,D/2)=cos(angle),
    [D/2,D)=sin(angle) for each row's position.
    """
    B, S, H, D = q.shape
    assert D % 2 == 0, "head_dim must be even for rotate_half"
    assert cs.shape == (B, S, D)
    hd = H * D

    if vmem_limit_bytes is None:
        vmem_limit_bytes = _DEFAULT_VMEM_LIMIT_BYTES
    ts = _choose_seq_tile(B, S, H, D, q.dtype, vmem_limit_bytes) if seq_tile is None else seq_tile

    # Free reshape (adjacent dims): lane axis becomes H*D.
    q2 = q.reshape(B, S, hd)
    k2 = k.reshape(B, S, hd)

    # Leading size-1 batch dim squeezed out of the kernel tiles.
    qk_spec = pl.BlockSpec((None, ts, hd), lambda b, s: (b, s, 0))
    cs_spec = pl.BlockSpec((None, ts, D), lambda b, s: (b, s, 0))

    # Optional in-place update (requires the caller to donate q/k at the jit
    # boundary, otherwise XLA inserts a defensive copy).
    io_aliases = {0: 0, 1: 1} if alias_outputs else {}

    kernel = functools.partial(_rope_kernel, heads=H, head_dim=D)
    qo, ko = pl.pallas_call(
        kernel,
        out_shape=(
            jax.ShapeDtypeStruct((B, S, hd), q.dtype),
            jax.ShapeDtypeStruct((B, S, hd), k.dtype),
        ),
        grid=(B, pl.cdiv(S, ts)),
        in_specs=[qk_spec, qk_spec, cs_spec],
        out_specs=(qk_spec, qk_spec),
        input_output_aliases=io_aliases,
        compiler_params=pltpu.CompilerParams(
            dimension_semantics=("parallel", "parallel"),
            vmem_limit_bytes=int(vmem_limit_bytes),
        ),
    )(q2, k2, cs)
    return qo.reshape(B, S, H, D), ko.reshape(B, S, H, D)


class RotaryPositionalEmbedding:
    """JAX/Pallas port of the PyTorch RotaryPositionalEmbedding module."""

    def __init__(self, dim: int, max_position_embeddings: int = 2048, base: float = 10000.0):
        self.dim = dim
        self.base = base
        self.max_position_embeddings = max_position_embeddings
        self.inv_freq = base ** (-(jnp.arange(0, dim, 2, dtype=jnp.float32) / dim))
        self._set_sin_cos_cache(max_position_embeddings)

    def _set_sin_cos_cache(self, seq_len: int) -> None:
        self.max_seq_len_cached = seq_len
        t = jnp.arange(seq_len, dtype=jnp.float32)
        angles_h = jnp.outer(t, self.inv_freq)                     # [seq_len, dim/2]
        angles = jnp.concatenate([angles_h, angles_h], axis=1)     # [seq_len, dim]
        # Full-width buffers kept for parity with the PyTorch module / reference check.
        self.cos_cached = jnp.cos(angles)
        self.sin_cached = jnp.sin(angles)
        # Packed half-width table read by the kernel path: halves gather traffic.
        self.cs_half_cached = jnp.concatenate([jnp.cos(angles_h), jnp.sin(angles_h)], axis=1)

    def __call__(self, q, k, position_ids, *, seq_len: int | None = None):
        # No host sync / no traced .max(): the cache is pre-sized to
        # max_position_embeddings; pass a static `seq_len` to regrow it.
        if seq_len is not None and seq_len > self.max_seq_len_cached:
            self._set_sin_cos_cache(int(seq_len))
        dtype = q.dtype
        # Gather the packed half-width [B, S, dim] table (XLA glue); the rotation
        # and cos/sin expansion run in the Pallas kernel.
        cs = self.cs_half_cached.astype(dtype)[position_ids]
        return rope_pallas(q, k, cs)


def _rotate_half_ref(x):
    half = x.shape[-1] // 2
    return jnp.concatenate([-x[..., half:], x[..., :half]], axis=-1)


def _reference(q, k, cos_cached, sin_cached, position_ids):
    cos = cos_cached.astype(q.dtype)[position_ids][:, :, None, :]  # [B,S,1,D]
    sin = sin_cached.astype(q.dtype)[position_ids][:, :, None, :]
    q_embed = q * cos + _rotate_half_ref(q) * sin
    k_embed = k * cos + _rotate_half_ref(k) * sin
    return q_embed, k_embed


if __name__ == "__main__":
    B, S, H, D = 2, 8, 4, 32
    MAX_POS = 64

    key = jax.random.PRNGKey(0)
    kq, kk, kp = jax.random.split(key, 3)
    q = jax.random.normal(kq, (B, S, H, D), dtype=jnp.float32)
    k = jax.random.normal(kk, (B, S, H, D), dtype=jnp.float32)
    # Non-monotonic position ids (as allowed by the module, e.g. GLM infilling).
    position_ids = jax.random.randint(kp, (B, S), 0, MAX_POS, dtype=jnp.int32)

    rope = RotaryPositionalEmbedding(dim=D, max_position_embeddings=MAX_POS, base=10000.0)

    # The whole op jits (no host sync in __call__).
    rope_jit = jax.jit(lambda q, k, pid: rope(q, k, pid))
    q_out, k_out = rope_jit(q, k, position_ids)
    jax.block_until_ready((q_out, k_out))

    q_ref, k_ref = _reference(q, k, rope.cos_cached, rope.sin_cached, position_ids)
    assert jnp.allclose(q_out, q_ref, rtol=1e-5, atol=1e-5)
    assert jnp.allclose(k_out, k_ref, rtol=1e-5, atol=1e-5)

    print("KERNEL_OK")
</pallas_src>

<mosaic_0001>
module attributes {stable_mosaic.version = 11 : i64} {
  func.func @_rope_kernel(%arg0: i32, %arg1: i32, %arg2: memref<1x8x128xf32, #tpu.memory_space<vmem>>, %arg3: memref<1x8x128xf32, #tpu.memory_space<vmem>>, %arg4: memref<1x8x32xf32, #tpu.memory_space<vmem>>, %arg5: memref<1x8x128xf32, #tpu.memory_space<vmem>>, %arg6: memref<1x8x128xf32, #tpu.memory_space<vmem>>) attributes {dimension_semantics = [#tpu.dimension_semantics<parallel>, #tpu.dimension_semantics<parallel>], iteration_bounds = array<i64: 2, 1>, scalar_prefetch = 0 : i64, scratch_operands = 0 : i64, tpu.core_type = #tpu.core_type<tc>, window_params = [{transform_indices = @transform_0, window_bounds = array<i64: 1, 8, 128>}, {transform_indices = @transform_1, window_bounds = array<i64: 1, 8, 128>}, {transform_indices = @transform_2, window_bounds = array<i64: 1, 8, 32>}, {transform_indices = @transform_3, window_bounds = array<i64: 1, 8, 128>}, {transform_indices = @transform_4, window_bounds = array<i64: 1, 8, 128>}]} {
    %c0 = arith.constant 0 : index
    %c0_0 = arith.constant 0 : index
    %c0_1 = arith.constant 0 : index
    %0 = vector.load %arg2[%c0, %c0_0, %c0_1] : memref<1x8x128xf32, #tpu.memory_space<vmem>>, vector<1x8x128xf32>
    %1 = vector.shape_cast %0 : vector<1x8x128xf32> to vector<8x128xf32>
    %c0_2 = arith.constant 0 : index
    %c0_3 = arith.constant 0 : index
    %c0_4 = arith.constant 0 : index
    %2 = vector.load %arg3[%c0_2, %c0_3, %c0_4] : memref<1x8x128xf32, #tpu.memory_space<vmem>>, vector<1x8x128xf32>
    %3 = vector.shape_cast %2 : vector<1x8x128xf32> to vector<8x128xf32>
    %c0_5 = arith.constant 0 : index
    %c0_6 = arith.constant 0 : index
    %c0_7 = arith.constant 0 : index
    %4 = vector.load %arg4[%c0_5, %c0_6, %c0_7] : memref<1x8x32xf32, #tpu.memory_space<vmem>>, vector<1x8x32xf32>
    %5 = vector.shape_cast %4 : vector<1x8x32xf32> to vector<8x32xf32>
    %6 = vector.extract_strided_slice %5 {offsets = [0, 0], sizes = [8, 16], strides = [1, 1]} : vector<8x32xf32> to vector<8x16xf32>
    %7 = vector.extract_strided_slice %5 {offsets = [0, 16], sizes = [8, 16], strides = [1, 1]} : vector<8x32xf32> to vector<8x16xf32>
    %8 = tpu.concatenate %6, %6, %6, %6, %6, %6, %6, %6 in 1 : vector<8x16xf32>, vector<8x16xf32>, vector<8x16xf32>, vector<8x16xf32>, vector<8x16xf32>, vector<8x16xf32>, vector<8x16xf32>, vector<8x16xf32> -> vector<8x128xf32>
    %cst = arith.constant 0.000000e+00 : f32
    %9 = vector.broadcast %cst : f32 to vector<8x16xf32>
    %10 = arith.subf %9, %7 : vector<8x16xf32>
    %11 = tpu.concatenate %10, %7, %10, %7, %10, %7, %10, %7 in 1 : vector<8x16xf32>, vector<8x16xf32>, vector<8x16xf32>, vector<8x16xf32>, vector<8x16xf32>, vector<8x16xf32>, vector<8x16xf32>, vector<8x16xf32> -> vector<8x128xf32>
    %12 = tpu.iota {dimensions = array<i32: 1>} : vector<1x128xi32>
    %c31_i32 = arith.constant 31 : i32
    %13 = vector.broadcast %c31_i32 : i32 to vector<1x128xi32>
    %14 = arith.andi %12, %13 : vector<1x128xi32>
    %c16_i32 = arith.constant 16 : i32
    %15 = vector.broadcast %c16_i32 : i32 to vector<1x128xi32>
    %16 = arith.cmpi slt, %14, %15 : vector<1x128xi32>
    %17 = arith.mulf %1, %8 : vector<8x128xf32>
    %c16_i32_8 = arith.constant 16 : i32
    %18 = tpu.dynamic_rotate %1 by %c16_i32_8 dim 1 : vector<8x128xf32>, i32 -> vector<8x128xf32>
    %c112_i32 = arith.constant 112 : i32
    %19 = tpu.dynamic_rotate %1 by %c112_i32 dim 1 : vector<8x128xf32>, i32 -> vector<8x128xf32>
    %20 = vector.shape_cast %16 : vector<1x128xi1> to vector<1x128xi1>
    %21 = vector.broadcast %20 : vector<1x128xi1> to vector<8x128xi1>
    %22 = arith.select %21, %19, %18 : vector<8x128xi1>, vector<8x128xf32>
    %23 = arith.mulf %22, %11 : vector<8x128xf32>
    %24 = arith.addf %17, %23 : vector<8x128xf32>
    %c0_9 = arith.constant 0 : index
    %c0_10 = arith.constant 0 : index
    %c0_11 = arith.constant 0 : index
    %25 = vector.load %arg5[%c0_9, %c0_10, %c0_11] : memref<1x8x128xf32, #tpu.memory_space<vmem>>, vector<1x8x128xf32>
    %26 = vector.shape_cast %25 : vector<1x8x128xf32> to vector<8x128xf32>
    %27 = vector.shape_cast %24 : vector<8x128xf32> to vector<1x8x128xf32>
    tpu.vector_store %arg5[%c0_9, %c0_10, %c0_11], %27 {strides = array<i32>} : memref<1x8x128xf32, #tpu.memory_space<vmem>>, vector<1x8x128xf32>,
    %28 = arith.mulf %3, %8 : vector<8x128xf32>
    %c16_i32_12 = arith.constant 16 : i32
    %29 = tpu.dynamic_rotate %3 by %c16_i32_12 dim 1 : vector<8x128xf32>, i32 -> vector<8x128xf32>
    %c112_i32_13 = arith.constant 112 : i32
    %30 = tpu.dynamic_rotate %3 by %c112_i32_13 dim 1 : vector<8x128xf32>, i32 -> vector<8x128xf32>
    %31 = vector.shape_cast %16 : vector<1x128xi1> to vector<1x128xi1>
    %32 = vector.broadcast %31 : vector<1x128xi1> to vector<8x128xi1>
    %33 = arith.select %32, %30, %29 : vector<8x128xi1>, vector<8x128xf32>
    %34 = arith.mulf %33, %11 : vector<8x128xf32>
    %35 = arith.addf %28, %34 : vector<8x128xf32>
    %c0_14 = arith.constant 0 : index
    %c0_15 = arith.constant 0 : index
    %c0_16 = arith.constant 0 : index
    %36 = vector.load %arg6[%c0_14, %c0_15, %c0_16] : memref<1x8x128xf32, #tpu.memory_space<vmem>>, vector<1x8x128xf32>
    %37 = vector.shape_cast %36 : vector<1x8x128xf32> to vector<8x128xf32>
    %38 = vector.shape_cast %35 : vector<8x128xf32> to vector<1x8x128xf32>
    tpu.vector_store %arg6[%c0_14, %c0_15, %c0_16], %38 {strides = array<i32>} : memref<1x8x128xf32, #tpu.memory_space<vmem>>, vector<1x8x128xf32>,
    return
  }
  func.func @transform_0(%arg0: i32, %arg1: i32) -> (i32, i32, i32) {
    %c0_i32 = arith.constant 0 : i32
    %c0_i32_0 = arith.constant 0 : i32
    return %arg0, %arg1, %c0_i32 : i32, i32, i32
  }
  func.func @transform_1(%arg0: i32, %arg1: i32) -> (i32, i32, i32) {
    %c0_i32 = arith.constant 0 : i32
    %c0_i32_0 = arith.constant 0 : i32
    return %arg0, %arg1, %c0_i32 : i32, i32, i32
  }
  func.func @transform_2(%arg0: i32, %arg1: i32) -> (i32, i32, i32) {
    %c0_i32 = arith.constant 0 : i32
    %c0_i32_0 = arith.constant 0 : i32
    return %arg0, %arg1, %c0_i32 : i32, i32, i32
  }
  func.func @transform_3(%arg0: i32, %arg1: i32) -> (i32, i32, i32) {
    %c0_i32 = arith.constant 0 : i32
    %c0_i32_0 = arith.constant 0 : i32
    return %arg0, %arg1, %c0_i32 : i32, i32, i32
  }
  func.func @transform_4(%arg0: i32, %arg1: i32) -> (i32, i32, i32) {
    %c0_i32 = arith.constant 0 : i32
    %c0_i32_0 = arith.constant 0 : i32
    return %arg0, %arg1, %c0_i32 : i32, i32, i32
  }
}

</mosaic_0001>

<llo_original>
// kernel: _lambda_.1
$region0: #{_lambda_.1}
  #allocation0 [shape = 'u32[]', space=smem, size = 0x4, offset = 0x4, fixed_abs, tag = 'smem constant byte address 0x4 - core index']
  #allocation1 [shape = 'u32[144,128]{1,0:T(1,128)}', space=vmem, size = 0x12000, scoped, tag = 'internal scratch']
  %s0 = inlined_call_operand.vmem [shape: f32[2,8,128], index: 0, kind: input, shape index: {}]
  %s1 = inlined_call_operand.vmem [shape: f32[2,8,128], index: 1, kind: input, shape index: {}]
  %s2 = inlined_call_operand.vmem [shape: f32[2,8,32], index: 2, kind: input, shape index: {}]
  %s3 = inlined_call_operand.vmem [shape: f32[2,8,128], index: 3, kind: output, shape index: {0}]
  %s4 = inlined_call_operand.vmem [shape: f32[2,8,128], index: 4, kind: output, shape index: {1}]
  %5 = xla_tuple %s3, %s4
  %s6 = sld [smem:[#allocation0]]
  $region53: #{_lambda_.1} parent=0
    _
  %s8 = ssub.s32 1, %s6
  %s9 = scalar_select 0, %s8, %s6
  loop: start=0, step=1, limit=4
  $region2: #{_lambda_.1} parent=0 // loop_pre_header
    _
  $region3: #{_lambda_.1} parent=0 // loop_header
    %s11 = sphi 0, %s15
    %p12 = scmp.ge.s32.totalorder %s11, 4
    %s18 = sphi 0, %s30
    %s19 = sphi 0, %s26
    %s20 = sphi 0, %s18
    %s21 = sphi 0, %s19
    %s22 = sphi 0, %s20
    %s23 = sphi 0, %s21
    %s35 = sphi 0, %s37
    %s38 = sphi 0, %s35
    %s39 = sphi 0, %s38
    %s55 = sphi 0, %s39
    %s63 = sphi 0, %s65
    %s66 = sphi 0, %s63
    %s67 = sphi 0, %s66
    %s83 = sphi 0, %s67
    %s91 = sphi 0, %s93
    %s94 = sphi 0, %s91
    %s95 = sphi 0, %s94
    %s111 = sphi 0, %s95
    %s119 = sphi 0, %s121
    %s122 = sphi 0, %s119
    %s123 = sphi 0, %s122
    %s139 = sphi 0, %s123
    %s147 = sphi 0, %s149
    %s150 = sphi 0, %s147
    %s151 = sphi 0, %s150
    %s167 = sphi 0, %s151
  $region4: #{_lambda_.1} parent=0 // loop_header_branch
    %14 = sbr.rel (%p12) target = $region8
  $region5: #{_lambda_.1} parent=0 // loop_body
    %s16 = ssub.s32 %s11, 1
    %s17 = ssub.s32 %s11, 2
    %s24 = sadd.s32 1, %s19
    %p25 = scmp.ge.s32.totalorder %s24, 1
    %s26 = scalar_select %p25, 0, %s24
    %s27 = sadd.s32 1, %s18
    %s28 = scalar_select %p25, %s27, %s18
    %p29 = scmp.ge.s32.totalorder %s28, 2
    %s30 = scalar_select %p29, 0, %s28
    %s31 = ssub.s32 %s18, %s30
    %s32 = ssub.s32 %s19, %s26
    %s33 = sor.u32 %s31, %s32
    %p34 = scmp.eq.s32.totalorder %s33, 0
    %s36 = sadd.s32 %s35, 1
    %s37 = scalar_select %p34, %s35, %s36
    %p40 = pneg %p34
    %p41 = scmp.eq.s32.totalorder %s11, 1
    %p42 = por %p40, %p41
    %p43 = scmp.ne.s32.totalorder %s35, %s38
    %p44 = scmp.eq.s32.totalorder %s11, 0
    %p45 = por %p43, %p44
    %p46 = scmp.ne.s32.totalorder %s35, %s38
    %p47 = scmp.eq.s32.totalorder %s16, 1
    %p48 = por %p46, %p47
    %p49 = scmp.ne.s32.totalorder %s38, %s39
    %p50 = scmp.eq.s32.totalorder %s16, 0
    %p51 = por %p49, %p50
    %p52 = scmp.ne.s32.totalorder %s38, %s39
    %p53 = scmp.eq.s32.totalorder %s17, 1
    %p54 = por %p52, %p53
    %p56 = scmp.ne.s32.totalorder %s39, %s55
    %p57 = scmp.eq.s32.totalorder %s17, 0
    %p58 = por %p56, %p57
    %s59 = ssub.s32 %s18, %s30
    %s60 = ssub.s32 %s19, %s26
    %s61 = sor.u32 %s59, %s60
    %p62 = scmp.eq.s32.totalorder %s61, 0
    %s64 = sadd.s32 %s63, 1
    %s65 = scalar_select %p62, %s63, %s64
    %p68 = pneg %p62
    %p69 = scmp.eq.s32.totalorder %s11, 1
    %p70 = por %p68, %p69
    %p71 = scmp.ne.s32.totalorder %s63, %s66
    %p72 = scmp.eq.s32.totalorder %s11, 0
    %p73 = por %p71, %p72
    %p74 = scmp.ne.s32.totalorder %s63, %s66
    %p75 = scmp.eq.s32.totalorder %s16, 1
    %p76 = por %p74, %p75
    %p77 = scmp.ne.s32.totalorder %s66, %s67
    %p78 = scmp.eq.s32.totalorder %s16, 0
    %p79 = por %p77, %p78
    %p80 = scmp.ne.s32.totalorder %s66, %s67
    %p81 = scmp.eq.s32.totalorder %s17, 1
    %p82 = por %p80, %p81
    %p84 = scmp.ne.s32.totalorder %s67, %s83
    %p85 = scmp.eq.s32.totalorder %s17, 0
    %p86 = por %p84, %p85
    %s87 = ssub.s32 %s18, %s30
    %s88 = ssub.s32 %s19, %s26
    %s89 = sor.u32 %s87, %s88
    %p90 = scmp.eq.s32.totalorder %s89, 0
    %s92 = sadd.s32 %s91, 1
    %s93 = scalar_select %p90, %s91, %s92
    %p96 = pneg %p90
    %p97 = scmp.eq.s32.totalorder %s11, 1
    %p98 = por %p96, %p97
    %p99 = scmp.ne.s32.totalorder %s91, %s94
    %p100 = scmp.eq.s32.totalorder %s11, 0
    %p101 = por %p99, %p100
    %p102 = scmp.ne.s32.totalorder %s91, %s94
    %p103 = scmp.eq.s32.totalorder %s16, 1
    %p104 = por %p102, %p103
    %p105 = scmp.ne.s32.totalorder %s94, %s95
    %p106 = scmp.eq.s32.totalorder %s16, 0
    %p107 = por %p105, %p106
    %p108 = scmp.ne.s32.totalorder %s94, %s95
    %p109 = scmp.eq.s32.totalorder %s17, 1
    %p110 = por %p108, %p109
    %p112 = scmp.ne.s32.totalorder %s95, %s111
    %p113 = scmp.eq.s32.totalorder %s17, 0
    %p114 = por %p112, %p113
    %s115 = ssub.s32 %s18, %s30
    %s116 = ssub.s32 %s19, %s26
    %s117 = sor.u32 %s115, %s116
    %p118 = scmp.eq.s32.totalorder %s117, 0
    %s120 = sadd.s32 %s119, 1
    %s121 = scalar_select %p118, %s119, %s120
    %p124 = pneg %p118
    %p125 = scmp.eq.s32.totalorder %s11, 1
    %p126 = por %p124, %p125
    %p127 = scmp.ne.s32.totalorder %s119, %s122
    %p128 = scmp.eq.s32.totalorder %s11, 0
    %p129 = por %p127, %p128
    %p130 = scmp.ne.s32.totalorder %s119, %s122
    %p131 = scmp.eq.s32.totalorder %s16, 1
    %p132 = por %p130, %p131
    %p133 = scmp.ne.s32.totalorder %s122, %s123
    %p134 = scmp.eq.s32.totalorder %s16, 0
    %p135 = por %p133, %p134
    %p136 = scmp.ne.s32.totalorder %s122, %s123
    %p137 = scmp.eq.s32.totalorder %s17, 1
    %p138 = por %p136, %p137
    %p140 = scmp.ne.s32.totalorder %s123, %s139
    %p141 = scmp.eq.s32.totalorder %s17, 0
    %p142 = por %p140, %p141
    %s143 = ssub.s32 %s18, %s30
    %s144 = ssub.s32 %s19, %s26
    %s145 = sor.u32 %s143, %s144
    %p146 = scmp.eq.s32.totalorder %s145, 0
    %s148 = sadd.s32 %s147, 1
    %s149 = scalar_select %p146, %s147, %s148
    %p152 = pneg %p146
    %p153 = scmp.eq.s32.totalorder %s11, 1
    %p154 = por %p152, %p153
    %p155 = scmp.ne.s32.totalorder %s147, %s150
    %p156 = scmp.eq.s32.totalorder %s11, 0
    %p157 = por %p155, %p156
    %p158 = scmp.ne.s32.totalorder %s147, %s150
    %p159 = scmp.eq.s32.totalorder %s16, 1
    %p160 = por %p158, %p159
    %p161 = scmp.ne.s32.totalorder %s150, %s151
    %p162 = scmp.eq.s32.totalorder %s16, 0
    %p163 = por %p161, %p162
    %p164 = scmp.ne.s32.totalorder %s150, %s151
    %p165 = scmp.eq.s32.totalorder %s17, 1
    %p166 = por %p164, %p165
    %p168 = scmp.ne.s32.totalorder %s151, %s167
    %p169 = scmp.eq.s32.totalorder %s17, 0
    %p170 = por %p168, %p169
    %p171 = scmp.le.s32.totalorder 1, %s11
    %p172 = scmp.lt.s32.totalorder %s11, 3
    %p173 = pnand %p171, %p172
    %p174 = pneg %p173
    // Predicated region
    $region9: #{_lambda_.1} parent=5 // pred_check
      _
    $region10: #{_lambda_.1} parent=5 // pred_check_branch
      %176 = sbr.rel (%p173) target = $region12
    $region11: #{_lambda_.1} parent=5 // pred_region
      %s177 = ssub.s32 %s11, 1
    $region12: #{_lambda_.1} parent=5 // pred_fallthru
      _
    %p178 = scmp.lt.s32.totalorder %s11, 2
    // Predicated region
    $region13: #{_lambda_.1} parent=5 // pred_check
      %p179 = pneg %p178
    $region14: #{_lambda_.1} parent=5 // pred_check_branch
      %181 = sbr.rel (%p179) target = $region16
    $region15: #{_lambda_.1} parent=5 // pred_region
      // Predicated region
      $region17: #{_lambda_.1} parent=15 // pred_check
        %p182 = pneg %p45
      $region18: #{_lambda_.1} parent=15 // pred_check_branch
        %184 = sbr.rel (%p182) target = $region20
      $region19: #{_lambda_.1} parent=15 // pred_region
        %p185 = scmp.lt.s32.totalorder %s18, 1
        %s186 = scalar_select %p185, %s18, 1
        %p187 = scmp.lt.s32.totalorder %s19, 0
        %s188 = scalar_select %p187, %s19, 0
        %s189 = sadd.s32 %s188, %s186
        %s190 = smul.addr %s189, 8
        %s191 = scalar_lea.vmem %s0, %s190
      $region20: #{_lambda_.1} parent=15 // pred_fallthru
        _
      // Predicated region
      $region21: #{_lambda_.1} parent=15 // pred_check
        %p192 = pneg %p73
      $region22: #{_lambda_.1} parent=15 // pred_check_branch
        %194 = sbr.rel (%p192) target = $region24
      $region23: #{_lambda_.1} parent=15 // pred_region
        %p195 = scmp.lt.s32.totalorder %s18, 1
        %s196 = scalar_select %p195, %s18, 1
        %p197 = scmp.lt.s32.totalorder %s19, 0
        %s198 = scalar_select %p197, %s19, 0
        %s199 = sadd.s32 %s198, %s196
        %s200 = smul.addr %s199, 8
        %s201 = scalar_lea.vmem %s1, %s200
      $region24: #{_lambda_.1} parent=15 // pred_fallthru
        _
      // Predicated region
      $region25: #{_lambda_.1} parent=15 // pred_check
        %p202 = pneg %p101
      $region26: #{_lambda_.1} parent=15 // pred_check_branch
        %204 = sbr.rel (%p202) target = $region28
      $region27: #{_lambda_.1} parent=15 // pred_region
        %p205 = scmp.lt.s32.totalorder %s18, 1
        %s206 = scalar_select %p205, %s18, 1
        %p207 = scmp.lt.s32.totalorder %s19, 0
        %s208 = scalar_select %p207, %s19, 0
        %s209 = sadd.s32 %s208, %s206
        %s210 = smul.addr %s209, 8
        %s211 = scalar_lea.vmem %s2, %s210
      $region28: #{_lambda_.1} parent=15 // pred_fallthru
        _
    $region16: #{_lambda_.1} parent=5 // pred_fallthru
      _
    %p212 = scmp.le.s32.totalorder 1, %s11
    %p213 = scmp.lt.s32.totalorder %s11, 3
    %p214 = pnand %p212, %p213
    %p215 = pneg %p214
    // Predicated region
    $region29: #{_lambda_.1} parent=5 // pred_check
      _
    $region30: #{_lambda_.1} parent=5 // pred_check_branch
      %217 = sbr.rel (%p214) target = $region32
    $region31: #{_lambda_.1} parent=5 // pred_region
      %s218 = ssub.s32 %s11, 1
      %p219 = scmp.lt.s32.totalorder %s20, 1
      %s220 = scalar_select %p219, %s20, 1
      %p221 = scmp.lt.s32.totalorder %s21, 0
      %s222 = scalar_select %p221, %s21, 0
      %s223 = sadd.s32 %s222, %s220
      %s224 = smul.addr %s223, 8
      %s225 = scalar_lea.vmem %s0, %s224
      %p226 = pneg %p51
      %p227 = pneg %p48
      %p228 = scmp.lt.s32.totalorder %s20, 1
      %s229 = scalar_select %p228, %s20, 1
      %p230 = scmp.lt.s32.totalorder %s21, 0
      %s231 = scalar_select %p230, %s21, 0
      %s232 = sadd.s32 %s231, %s229
      %s233 = smul.addr %s232, 8
      %s234 = scalar_lea.vmem %s1, %s233
      %p235 = pneg %p79
      %p236 = pneg %p76
      %p237 = scmp.lt.s32.totalorder %s20, 1
      %s238 = scalar_select %p237, %s20, 1
      %p239 = scmp.lt.s32.totalorder %s21, 0
      %s240 = scalar_select %p239, %s21, 0
      %s241 = sadd.s32 %s240, %s238
      %s242 = smul.addr %s241, 8
      %s243 = scalar_lea.vmem %s2, %s242
      %p244 = pneg %p107
      %p245 = pneg %p104
      %p246 = pneg %p135
      %p247 = pneg %p132
      %p248 = scmp.lt.s32.totalorder %s20, 1
      %s249 = scalar_select %p248, %s20, 1
      %p250 = scmp.lt.s32.totalorder %s21, 0
      %s251 = scalar_select %p250, %s21, 0
      %s252 = sadd.s32 %s251, %s249
      %s253 = smul.addr %s252, 8
      %s254 = scalar_lea.vmem %s3, %s253
      %p255 = pneg %p163
      %p256 = pneg %p160
      %p257 = scmp.lt.s32.totalorder %s20, 1
      %s258 = scalar_select %p257, %s20, 1
      %p259 = scmp.lt.s32.totalorder %s21, 0
      %s260 = scalar_select %p259, %s21, 0
      %s261 = sadd.s32 %s260, %s258
      %s262 = smul.addr %s261, 8
      %s263 = scalar_lea.vmem %s4, %s262
      %p264 = scmp.lt.s32.totalorder %s20, 1
      %s265 = scalar_select %p264, %s20, 1
      %p266 = scmp.lt.s32.totalorder %s21, 0
      %s267 = scalar_select %p266, %s21, 0
      %s268 = sadd.s32 %s267, %s265
      %s269 = smul.addr %s268, 8
      %s270 = scalar_lea.vmem %s0, %s269
      %p271 = scmp.lt.s32.totalorder %s20, 1
      %s272 = scalar_select %p271, %s20, 1
      %p273 = scmp.lt.s32.totalorder %s21, 0
      %s274 = scalar_select %p273, %s21, 0
      %s275 = sadd.s32 %s274, %s272
      %s276 = smul.addr %s275, 8
      %s277 = scalar_lea.vmem %s1, %s276
      %p278 = scmp.lt.s32.totalorder %s20, 1
      %s279 = scalar_select %p278, %s20, 1
      %p280 = scmp.lt.s32.totalorder %s21, 0
      %s281 = scalar_select %p280, %s21, 0
      %s282 = sadd.s32 %s281, %s279
      %s283 = smul.addr %s282, 8
      %s284 = scalar_lea.vmem %s2, %s283
      %p285 = scmp.lt.s32.totalorder %s20, 1
      %s286 = scalar_select %p285, %s20, 1
      %p287 = scmp.lt.s32.totalorder %s21, 0
      %s288 = scalar_select %p287, %s21, 0
      %s289 = sadd.s32 %s288, %s286
      %s290 = smul.addr %s289, 8
      %s291 = scalar_lea.vmem %s3, %s290
      %p292 = scmp.lt.s32.totalorder %s20, 1
      %s293 = scalar_select %p292, %s20, 1
      %p294 = scmp.lt.s32.totalorder %s21, 0
      %s295 = scalar_select %p294, %s21, 0
      %s296 = sadd.s32 %s295, %s293
      %s297 = smul.addr %s296, 8
      %s298 = scalar_lea.vmem %s4, %s297
      %v299 = vld [vmem:[%s270] sm:$0xff]
      %v300 = vld [vmem:[%s277] sm:$0xff]
      %v301 = vld [vmem:[%s284] sm:$0xff]
      %303 = vrot.lane.b32.xlu0 %v301, 16
      %v304 = vpop.permute.xlu0 %303
      %306 = vrot.lane.b32.xlu0 %v301, 32
      %v307 = vpop.permute.xlu0 %306
      %309 = vrot.lane.b32.xlu0 %v301, 48
      %v310 = vpop.permute.xlu0 %309
      %312 = vrot.lane.b32.xlu0 %v301, 64
      %v313 = vpop.permute.xlu0 %312
      %315 = vrot.lane.b32.xlu0 %v301, 80
      %v316 = vpop.permute.xlu0 %315
      %318 = vrot.lane.b32.xlu0 %v301, 96
      %v319 = vpop.permute.xlu0 %318
      %321 = vrot.lane.b32.xlu0 %v301, 112
      %v322 = vpop.permute.xlu0 %321
      %vm324 = vcmask 130048
      %v325 = vsel %vm324, %v301, %v304
      %vm326 = vcmask 261120
      %v327 = vsel %vm326, %v325, %v307
      %vm328 = vcmask 392192
      %v329 = vsel %vm328, %v327, %v310
      %vm330 = vcmask 523264
      %v331 = vsel %vm330, %v329, %v313
      %vm332 = vcmask 654336
      %v333 = vsel %vm332, %v331, %v316
      %vm334 = vcmask 785408
      %v335 = vsel %vm334, %v333, %v319
      %vm336 = vcmask 916480
      %v337 = vsel %vm336, %v335, %v322
      %v338 = vsub.f32 0.0, %v301
      %340 = vrot.lane.b32.xlu0 %v338, 112
      %v341 = vpop.permute.xlu0 %340
      %343 = vrot.lane.b32.xlu0 %v338, 16
      %v344 = vpop.permute.xlu0 %343
      %346 = vrot.lane.b32.xlu0 %v338, 48
      %v347 = vpop.permute.xlu0 %346
      %349 = vrot.lane.b32.xlu0 %v338, 80
      %v350 = vpop.permute.xlu0 %349
      %v352 = vsel %vm324, %v341, %v301
      %v353 = vsel %vm326, %v352, %v344
      %v354 = vsel %vm328, %v353, %v307
      %v355 = vsel %vm330, %v354, %v347
      %v356 = vsel %vm332, %v355, %v313
      %v357 = vsel %vm334, %v356, %v350
      %v358 = vsel %vm336, %v357, %v319
      %v359 = vlaneseq
      %v360 = vand.u32 %v359, 127
      %v361 = vand.u32 %v360, 31
      %vm362 = vcmp.lt.s32.totalorder %v361, 16
      %v363 = vmul.f32 %v299, %v337
      %364 = vrot.lane.b32.xlu0 %v299, 16
      %v365 = vpop.permute.xlu0 %364
      %366 = vrot.lane.b32.xlu0 %v299, 112
      %v367 = vpop.permute.xlu0 %366
      %v368 = vsel %vm362, 1, 0
      %vm369 = vcmp.eq.s32.totalorder %v368, 1
      %v370 = vsel %vm369, %v367, %v365
      %v371 = vmul.f32 %v370, %v358
      %v372 = vadd.f32 %v363, %v371
      %373 = vst [vmem:[%s291] sm:$0xff] %v372
      %v374 = vmul.f32 %v300, %v337
      %375 = vrot.lane.b32.xlu0 %v300, 16
      %v376 = vpop.permute.xlu0 %375
      %377 = vrot.lane.b32.xlu0 %v300, 112
      %v378 = vpop.permute.xlu0 %377
      %v379 = vsel %vm369, %v378, %v376
      %v380 = vmul.f32 %v379, %v358
      %v381 = vadd.f32 %v374, %v380
      %382 = vst [vmem:[%s298] sm:$0xff] %v381
      %p383 = scmp.lt.s32.totalorder %s20, 1
      %s384 = scalar_select %p383, %s20, 1
      %p385 = scmp.lt.s32.totalorder %s21, 0
      %s386 = scalar_select %p385, %s21, 0
      %s387 = sadd.s32 %s386, %s384
      %s388 = smul.addr %s387, 8
      %s389 = scalar_lea.vmem %s3, %s388
      %p390 = scmp.lt.s32.totalorder %s20, 1
      %s391 = scalar_select %p390, %s20, 1
      %p392 = scmp.lt.s32.totalorder %s21, 0
      %s393 = scalar_select %p392, %s21, 0
      %s394 = sadd.s32 %s393, %s391
      %s395 = smul.addr %s394, 8
      %s396 = scalar_lea.vmem %s4, %s395
      // Predicated region
      $region33: #{_lambda_.1} parent=31 // pred_check
        %p397 = pneg %p132
      $region34: #{_lambda_.1} parent=31 // pred_check_branch
        %399 = sbr.rel (%p397) target = $region36
      $region35: #{_lambda_.1} parent=31 // pred_region
        _
      $region36: #{_lambda_.1} parent=31 // pred_fallthru
        _
      // Predicated region
      $region37: #{_lambda_.1} parent=31 // pred_check
        %p400 = pneg %p160
      $region38: #{_lambda_.1} parent=31 // pred_check_branch
        %402 = sbr.rel (%p400) target = $region40
      $region39: #{_lambda_.1} parent=31 // pred_region
        _
      $region40: #{_lambda_.1} parent=31 // pred_fallthru
        _
    $region32: #{_lambda_.1} parent=5 // pred_fallthru
      _
    %p403 = scmp.le.s32.totalorder 2, %s11
    // Predicated region
    $region41: #{_lambda_.1} parent=5 // pred_check
      %p404 = pneg %p403
    $region42: #{_lambda_.1} parent=5 // pred_check_branch
      %406 = sbr.rel (%p404) target = $region44
    $region43: #{_lambda_.1} parent=5 // pred_region
      %s407 = ssub.s32 %s11, 2
      // Predicated region
      $region45: #{_lambda_.1} parent=43 // pred_check
        %p408 = pneg %p138
      $region46: #{_lambda_.1} parent=43 // pred_check_branch
        %410 = sbr.rel (%p408) target = $region48
      $region47: #{_lambda_.1} parent=43 // pred_region
        %p411 = scmp.lt.s32.totalorder %s22, 1
        %s412 = scalar_select %p411, %s22, 1
        %p413 = scmp.lt.s32.totalorder %s23, 0
        %s414 = scalar_select %p413, %s23, 0
        %s415 = sadd.s32 %s414, %s412
        %s416 = smul.addr %s415, 8
        %s417 = scalar_lea.vmem %s3, %s416
      $region48: #{_lambda_.1} parent=43 // pred_fallthru
        _
      // Predicated region
      $region49: #{_lambda_.1} parent=43 // pred_check
        %p418 = pneg %p166
      $region50: #{_lambda_.1} parent=43 // pred_check_branch
        %420 = sbr.rel (%p418) target = $region52
      $region51: #{_lambda_.1} parent=43 // pred_region
        %p421 = scmp.lt.s32.totalorder %s22, 1
        %s422 = scalar_select %p421, %s22, 1
        %p423 = scmp.lt.s32.totalorder %s23, 0
        %s424 = scalar_select %p423, %s23, 0
        %s425 = sadd.s32 %s424, %s422
        %s426 = smul.addr %s425, 8
        %s427 = scalar_lea.vmem %s4, %s426
      $region52: #{_lambda_.1} parent=43 // pred_fallthru
        _
    $region44: #{_lambda_.1} parent=5 // pred_fallthru
      _
  $region6: #{_lambda_.1} parent=0 // loop_footer
    %s15 = sadd.s32 1, %s11
  $region7: #{_lambda_.1} parent=0 // loop_footer_branch
    %10 = sbr.rel target = $region3
  $region8: #{_lambda_.1} parent=0 // loop_exit
    _

</llo_original>
